<compile_context>
chip_gen: v7x
topology: tpu7x:2x2x1
jax: 0.10.0
libtpu: 0.0.40
codegen_flags: <defaults>
</compile_context>

<pallas_src>
import functools

import jax
import jax.numpy as jnp
from jax.experimental import pallas as pl
from jax.experimental.pallas import tpu as pltpu


STATE_DIM = 6
HIDDEN_DIM = 32          # small hidden dim for the synthetic test (module default is 256)
NUM_STEPS = 1000
TILE_S_MAX = 2048        # rows per grid step (multiple of 8); sweet spot per review


def _mlp_kernel(x_ref, b1e_ref, w1_ref, w2_ref, b2_ref, w3_ref, b3_ref,
                w4_ref, b4_ref, out_ref):
    """(Linear -> ReLU) x3 -> Linear on one [TILE_S, D] row-tile of one batch.

    The timestep embedding is pre-folded into the per-batch first-layer bias
    (b1e_ref), so the kernel never sees the concatenated K=D+1 input.
    """
    x = x_ref[0]                                               # [TILE_S, D]

    h = jnp.dot(x, w1_ref[...], preferred_element_type=jnp.float32)
    h = jnp.maximum(h + b1e_ref[0], 0.0)                       # [TILE_S, H]

    h = jnp.dot(h, w2_ref[...], preferred_element_type=jnp.float32)
    h = jnp.maximum(h + b2_ref[...], 0.0)                      # [TILE_S, H]

    h = jnp.dot(h, w3_ref[...], preferred_element_type=jnp.float32)
    h = jnp.maximum(h + b3_ref[...], 0.0)                      # [TILE_S, H]

    y = jnp.dot(h, w4_ref[...], preferred_element_type=jnp.float32)
    y = y + b4_ref[...]                                        # [TILE_S, D]

    out_ref[0] = y.astype(out_ref.dtype)


def _const_spec(shape):
    # Weight / bias block: full extent, constant index_map -> stays resident
    # in VMEM across all grid iterations.
    return pl.BlockSpec(shape, lambda b, i: tuple(0 for _ in shape))


@functools.partial(jax.jit, static_argnames=("num_steps",))
def diffusion_planner_forward(x, t, params, num_steps=NUM_STEPS):
    """Pallas equivalent of DiffusionTrajectoryPlanner.forward.

    Args:
      x: [B, S, state_dim] float32 trajectory.
      t: [B] int32 timestep.
      params: dict of MLP weights/biases (weights stored [in, out]).
    Returns:
      noise_pred: [B, S, state_dim] float32.
    """
    B, S, D = x.shape
    H = params["w2"].shape[0]

    # --- cheap JAX glue: fold the timestep column into the first-layer bias.
    # cat([x, t_col], -1) @ W1 == x @ W1[:D] + (t/num_steps) * W1[D]
    t_scale = t.astype(jnp.float32) / num_steps                    # [B]
    b1_eff = params["b1"][None, :] + t_scale[:, None] * params["w1"][D][None, :]
    b1_eff = b1_eff[:, None, :]                                    # [B, 1, H]
    w1x = params["w1"][:D, :]                                      # [D, H]

    b2 = params["b2"].reshape(1, H)
    b3 = params["b3"].reshape(1, H)
    b4 = params["b4"].reshape(1, D)

    # Row tile over the sequence axis; full extent if the sequence is small.
    tile_s = S if S <= TILE_S_MAX else TILE_S_MAX
    grid = (B, pl.cdiv(S, tile_s))

    out = pl.pallas_call(
        _mlp_kernel,
        out_shape=jax.ShapeDtypeStruct((B, S, D), jnp.float32),
        grid=grid,
        in_specs=[
            pl.BlockSpec((1, tile_s, D), lambda b, i: (b, i, 0)),   # x tile
            pl.BlockSpec((1, 1, H), lambda b, i: (b, 0, 0)),        # b1_eff[b]
            _const_spec((D, H)),                                     # w1[:D]
            _const_spec((H, H)), _const_spec((1, H)),                # w2, b2
            _const_spec((H, H)), _const_spec((1, H)),                # w3, b3
            _const_spec((H, D)), _const_spec((1, D)),                # w4, b4
        ],
        out_specs=pl.BlockSpec((1, tile_s, D), lambda b, i: (b, i, 0)),
        compiler_params=pltpu.CompilerParams(
            dimension_semantics=("parallel", "parallel")),
    )(x, b1_eff, w1x, params["w2"], b2, params["w3"], b3, params["w4"], b4)

    return out


def init_params(key, state_dim=STATE_DIM, hidden_dim=HIDDEN_DIM):
    """Deterministic synthetic weights matching nn.Linear shapes.

    Stored pre-transposed as [in, out] so the kernel does x @ W directly.
    """
    ks = jax.random.split(key, 8)

    def lin(kw, kb, fan_in, fan_out):
        bound = 1.0 / jnp.sqrt(fan_in)
        w = jax.random.uniform(kw, (fan_in, fan_out), jnp.float32, -bound, bound)
        b = jax.random.uniform(kb, (fan_out,), jnp.float32, -bound, bound)
        return w, b

    w1, b1 = lin(ks[0], ks[1], state_dim + 1, hidden_dim)
    w2, b2 = lin(ks[2], ks[3], hidden_dim, hidden_dim)
    w3, b3 = lin(ks[4], ks[5], hidden_dim, hidden_dim)
    w4, b4 = lin(ks[6], ks[7], hidden_dim, state_dim)
    return {"w1": w1, "b1": b1, "w2": w2, "b2": b2,
            "w3": w3, "b3": b3, "w4": w4, "b4": b4}


def _reference_forward(x, t, params, num_steps=NUM_STEPS):
    """Pure-JAX reference matching the torch module exactly (with concat)."""
    B, S, D = x.shape
    t_emb = (t.astype(jnp.float32) / num_steps)[:, None, None]
    t_emb = jnp.broadcast_to(t_emb, (B, S, 1))
    h = jnp.concatenate([x, t_emb], axis=-1)
    h = jax.nn.relu(h @ params["w1"] + params["b1"])
    h = jax.nn.relu(h @ params["w2"] + params["b2"])
    h = jax.nn.relu(h @ params["w3"] + params["b3"])
    return h @ params["w4"] + params["b4"]


# TODO(synk): sample() and compute_loss() (reverse-diffusion loop, beta/alpha_bar
# schedules, MSE loss) are host-side utilities outside forward() and are not
# translated to Pallas here.

if __name__ == "__main__":
    key = jax.random.PRNGKey(0)
    kx, kt, kp, kx2, kt2 = jax.random.split(key, 5)

    params = init_params(kp)

    # Small case consistent with the module.
    B, S = 2, 8
    x = jax.random.normal(kx, (B, S, STATE_DIM), jnp.float32)
    t = jax.random.randint(kt, (B,), 0, NUM_STEPS, dtype=jnp.int32)
    out = jax.block_until_ready(diffusion_planner_forward(x, t, params))
    ref = _reference_forward(x, t, params)
    assert out.shape == (B, S, STATE_DIM)
    assert jnp.allclose(out, ref, atol=1e-5, rtol=1e-5)

    # Larger case: exercises row tiling and a ragged trailing tile (3000 rows
    # with TILE_S=2048).  Per-row MLP, so block padding of the last tile is safe.
    B2, S2 = 4, 3000
    x2 = jax.random.normal(kx2, (B2, S2, STATE_DIM), jnp.float32)
    t2 = jax.random.randint(kt2, (B2,), 0, NUM_STEPS, dtype=jnp.int32)
    out2 = jax.block_until_ready(diffusion_planner_forward(x2, t2, params))
    ref2 = _reference_forward(x2, t2, params)
    assert out2.shape == (B2, S2, STATE_DIM)
    assert jnp.allclose(out2, ref2, atol=1e-5, rtol=1e-5)

    print("KERNEL_OK")
</pallas_src>

<mosaic_0001>
module attributes {stable_mosaic.version = 11 : i64} {
  func.func @_mlp_kernel(%arg0: i32, %arg1: i32, %arg2: memref<1x8x6xf32, #tpu.memory_space<vmem>>, %arg3: memref<1x1x32xf32, #tpu.memory_space<vmem>>, %arg4: memref<6x32xf32, #tpu.memory_space<vmem>>, %arg5: memref<32x32xf32, #tpu.memory_space<vmem>>, %arg6: memref<1x32xf32, #tpu.memory_space<vmem>>, %arg7: memref<32x32xf32, #tpu.memory_space<vmem>>, %arg8: memref<1x32xf32, #tpu.memory_space<vmem>>, %arg9: memref<32x6xf32, #tpu.memory_space<vmem>>, %arg10: memref<1x6xf32, #tpu.memory_space<vmem>>, %arg11: memref<1x8x6xf32, #tpu.memory_space<vmem>>) attributes {dimension_semantics = [#tpu.dimension_semantics<parallel>, #tpu.dimension_semantics<parallel>], iteration_bounds = array<i64: 2, 1>, scalar_prefetch = 0 : i64, scratch_operands = 0 : i64, tpu.core_type = #tpu.core_type<tc>, window_params = [{transform_indices = @transform_0, window_bounds = array<i64: 1, 8, 6>}, {transform_indices = @transform_1, window_bounds = array<i64: 1, 1, 32>}, {pipeline_mode = #tpu.pipeline_mode<synchronous>, transform_indices = @transform_2, window_bounds = array<i64: 6, 32>}, {pipeline_mode = #tpu.pipeline_mode<synchronous>, transform_indices = @transform_3, window_bounds = array<i64: 32, 32>}, {pipeline_mode = #tpu.pipeline_mode<synchronous>, transform_indices = @transform_4, window_bounds = array<i64: 1, 32>}, {pipeline_mode = #tpu.pipeline_mode<synchronous>, transform_indices = @transform_5, window_bounds = array<i64: 32, 32>}, {pipeline_mode = #tpu.pipeline_mode<synchronous>, transform_indices = @transform_6, window_bounds = array<i64: 1, 32>}, {pipeline_mode = #tpu.pipeline_mode<synchronous>, transform_indices = @transform_7, window_bounds = array<i64: 32, 6>}, {pipeline_mode = #tpu.pipeline_mode<synchronous>, transform_indices = @transform_8, window_bounds = array<i64: 1, 6>}, {transform_indices = @transform_9, window_bounds = array<i64: 1, 8, 6>}]} {
    %c0 = arith.constant 0 : index
    %c0_0 = arith.constant 0 : index
    %c0_1 = arith.constant 0 : index
    %0 = vector.load %arg2[%c0, %c0_0, %c0_1] : memref<1x8x6xf32, #tpu.memory_space<vmem>>, vector<1x8x6xf32>
    %1 = vector.shape_cast %0 : vector<1x8x6xf32> to vector<8x6xf32>
    %c0_2 = arith.constant 0 : index
    %c0_3 = arith.constant 0 : index
    %2 = vector.load %arg4[%c0_2, %c0_3] : memref<6x32xf32, #tpu.memory_space<vmem>>, vector<6x32xf32>
    %cst = arith.constant dense<0.000000e+00> : vector<8x32xf32>
    %3 = tpu.matmul %1, %2, %cst {dimension_numbers = #tpu.dot_dimension_numbers<[1], [0], [0], [1], [0, 0, 1, 1], [], []>} : vector<8x6xf32>, vector<6x32xf32>, vector<8x32xf32> -> vector<8x32xf32>
    %c0_4 = arith.constant 0 : index
    %c0_5 = arith.constant 0 : index
    %c0_6 = arith.constant 0 : index
    %4 = vector.load %arg3[%c0_4, %c0_5, %c0_6] : memref<1x1x32xf32, #tpu.memory_space<vmem>>, vector<1x1x32xf32>
    %5 = vector.shape_cast %4 : vector<1x1x32xf32> to vector<1x32xf32>
    %6 = vector.broadcast %5 : vector<1x32xf32> to vector<8x32xf32>
    %7 = arith.addf %3, %6 : vector<8x32xf32>
    %cst_7 = arith.constant 0.000000e+00 : f32
    %8 = vector.broadcast %cst_7 : f32 to vector<8x32xf32>
    %9 = arith.maximumf %7, %8 : vector<8x32xf32>
    %c0_8 = arith.constant 0 : index
    %c0_9 = arith.constant 0 : index
    %10 = vector.load %arg5[%c0_8, %c0_9] : memref<32x32xf32, #tpu.memory_space<vmem>>, vector<32x32xf32>
    %cst_10 = arith.constant dense<0.000000e+00> : vector<8x32xf32>
    %11 = tpu.matmul %9, %10, %cst_10 {dimension_numbers = #tpu.dot_dimension_numbers<[1], [0], [0], [1], [0, 0, 1, 1], [], []>} : vector<8x32xf32>, vector<32x32xf32>, vector<8x32xf32> -> vector<8x32xf32>
    %c0_11 = arith.constant 0 : index
    %c0_12 = arith.constant 0 : index
    %12 = vector.load %arg6[%c0_11, %c0_12] : memref<1x32xf32, #tpu.memory_space<vmem>>, vector<1x32xf32>
    %13 = vector.broadcast %12 : vector<1x32xf32> to vector<8x32xf32>
    %14 = arith.addf %11, %13 : vector<8x32xf32>
    %cst_13 = arith.constant 0.000000e+00 : f32
    %15 = vector.broadcast %cst_13 : f32 to vector<8x32xf32>
    %16 = arith.maximumf %14, %15 : vector<8x32xf32>
    %c0_14 = arith.constant 0 : index
    %c0_15 = arith.constant 0 : index
    %17 = vector.load %arg7[%c0_14, %c0_15] : memref<32x32xf32, #tpu.memory_space<vmem>>, vector<32x32xf32>
    %cst_16 = arith.constant dense<0.000000e+00> : vector<8x32xf32>
    %18 = tpu.matmul %16, %17, %cst_16 {dimension_numbers = #tpu.dot_dimension_numbers<[1], [0], [0], [1], [0, 0, 1, 1], [], []>} : vector<8x32xf32>, vector<32x32xf32>, vector<8x32xf32> -> vector<8x32xf32>
    %c0_17 = arith.constant 0 : index
    %c0_18 = arith.constant 0 : index
    %19 = vector.load %arg8[%c0_17, %c0_18] : memref<1x32xf32, #tpu.memory_space<vmem>>, vector<1x32xf32>
    %20 = vector.broadcast %19 : vector<1x32xf32> to vector<8x32xf32>
    %21 = arith.addf %18, %20 : vector<8x32xf32>
    %cst_19 = arith.constant 0.000000e+00 : f32
    %22 = vector.broadcast %cst_19 : f32 to vector<8x32xf32>
    %23 = arith.maximumf %21, %22 : vector<8x32xf32>
    %c0_20 = arith.constant 0 : index
    %c0_21 = arith.constant 0 : index
    %24 = vector.load %arg9[%c0_20, %c0_21] : memref<32x6xf32, #tpu.memory_space<vmem>>, vector<32x6xf32>
    %cst_22 = arith.constant dense<0.000000e+00> : vector<8x6xf32>
    %25 = tpu.matmul %23, %24, %cst_22 {dimension_numbers = #tpu.dot_dimension_numbers<[1], [0], [0], [1], [0, 0, 1, 1], [], []>} : vector<8x32xf32>, vector<32x6xf32>, vector<8x6xf32> -> vector<8x6xf32>
    %c0_23 = arith.constant 0 : index
    %c0_24 = arith.constant 0 : index
    %26 = vector.load %arg10[%c0_23, %c0_24] : memref<1x6xf32, #tpu.memory_space<vmem>>, vector<1x6xf32>
    %27 = vector.broadcast %26 : vector<1x6xf32> to vector<8x6xf32>
    %28 = arith.addf %25, %27 : vector<8x6xf32>
    %c0_25 = arith.constant 0 : index
    %c0_26 = arith.constant 0 : index
    %c0_27 = arith.constant 0 : index
    %29 = vector.load %arg11[%c0_25, %c0_26, %c0_27] : memref<1x8x6xf32, #tpu.memory_space<vmem>>, vector<1x8x6xf32>
    %30 = vector.shape_cast %29 : vector<1x8x6xf32> to vector<8x6xf32>
    %31 = vector.shape_cast %28 : vector<8x6xf32> to vector<1x8x6xf32>
    tpu.vector_store %arg11[%c0_25, %c0_26, %c0_27], %31 {strides = array<i32>} : memref<1x8x6xf32, #tpu.memory_space<vmem>>, vector<1x8x6xf32>,
    return
  }
  func.func @transform_0(%arg0: i32, %arg1: i32) -> (i32, i32, i32) {
    %c0_i32 = arith.constant 0 : i32
    %c0_i32_0 = arith.constant 0 : i32
    return %arg0, %arg1, %c0_i32 : i32, i32, i32
  }
  func.func @transform_1(%arg0: i32, %arg1: i32) -> (i32, i32, i32) {
    %c0_i32 = arith.constant 0 : i32
    %c0_i32_0 = arith.constant 0 : i32
    %c0_i32_1 = arith.constant 0 : i32
    return %arg0, %c0_i32, %c0_i32_0 : i32, i32, i32
  }
  func.func @transform_2(%arg0: i32, %arg1: i32) -> (i32, i32) {
    %c0_i32 = arith.constant 0 : i32
    %c0_i32_0 = arith.constant 0 : i32
    %c0_i32_1 = arith.constant 0 : i32
    return %c0_i32, %c0_i32_0 : i32, i32
  }
  func.func @transform_3(%arg0: i32, %arg1: i32) -> (i32, i32) {
    %c0_i32 = arith.constant 0 : i32
    %c0_i32_0 = arith.constant 0 : i32
    %c0_i32_1 = arith.constant 0 : i32
    return %c0_i32, %c0_i32_0 : i32, i32
  }
  func.func @transform_4(%arg0: i32, %arg1: i32) -> (i32, i32) {
    %c0_i32 = arith.constant 0 : i32
    %c0_i32_0 = arith.constant 0 : i32
    %c0_i32_1 = arith.constant 0 : i32
    return %c0_i32, %c0_i32_0 : i32, i32
  }
  func.func @transform_5(%arg0: i32, %arg1: i32) -> (i32, i32) {
    %c0_i32 = arith.constant 0 : i32
    %c0_i32_0 = arith.constant 0 : i32
    %c0_i32_1 = arith.constant 0 : i32
    return %c0_i32, %c0_i32_0 : i32, i32
  }
  func.func @transform_6(%arg0: i32, %arg1: i32) -> (i32, i32) {
    %c0_i32 = arith.constant 0 : i32
    %c0_i32_0 = arith.constant 0 : i32
    %c0_i32_1 = arith.constant 0 : i32
    return %c0_i32, %c0_i32_0 : i32, i32
  }
  func.func @transform_7(%arg0: i32, %arg1: i32) -> (i32, i32) {
    %c0_i32 = arith.constant 0 : i32
    %c0_i32_0 = arith.constant 0 : i32
    %c0_i32_1 = arith.constant 0 : i32
    return %c0_i32, %c0_i32_0 : i32, i32
  }
  func.func @transform_8(%arg0: i32, %arg1: i32) -> (i32, i32) {
    %c0_i32 = arith.constant 0 : i32
    %c0_i32_0 = arith.constant 0 : i32
    %c0_i32_1 = arith.constant 0 : i32
    return %c0_i32, %c0_i32_0 : i32, i32
  }
  func.func @transform_9(%arg0: i32, %arg1: i32) -> (i32, i32, i32) {
    %c0_i32 = arith.constant 0 : i32
    %c0_i32_0 = arith.constant 0 : i32
    return %arg0, %arg1, %c0_i32 : i32, i32, i32
  }
}

</mosaic_0001>

<llo_original>
// kernel: diffusion_planner_forward.1
$region0: #{diffusion_planner_forward.1}
  #allocation0 [shape = 'u32[]', space=smem, size = 0x4, offset = 0x4, fixed_abs, tag = 'smem constant byte address 0x4 - core index']
  #allocation1 [shape = 'u32[144,128]{1,0:T(1,128)}', space=vmem, size = 0x12000, scoped, tag = 'internal scratch']
  %s0 = inlined_call_operand.vmem [shape: f32[2,8,6], index: 0, kind: input, shape index: {}]
  %s1 = inlined_call_operand.vmem [shape: f32[2,1,32], index: 1, kind: input, shape index: {}]
  %s2 = inlined_call_operand.vmem [shape: f32[6,32], index: 2, kind: input, shape index: {}]
  %s3 = inlined_call_operand.vmem [shape: f32[32,32], index: 3, kind: input, shape index: {}]
  %s4 = inlined_call_operand.vmem [shape: f32[1,32], index: 4, kind: input, shape index: {}]
  %s5 = inlined_call_operand.vmem [shape: f32[32,32], index: 5, kind: input, shape index: {}]
  %s6 = inlined_call_operand.vmem [shape: f32[1,32], index: 6, kind: input, shape index: {}]
  %s7 = inlined_call_operand.vmem [shape: f32[32,6], index: 7, kind: input, shape index: {}]
  %s8 = inlined_call_operand.vmem [shape: f32[1,6], index: 8, kind: input, shape index: {}]
  %s9 = inlined_call_operand.vmem [shape: f32[2,8,6], index: 9, kind: output, shape index: {}]
  %s10 = sld [smem:[#allocation0]]
  $region69: #{diffusion_planner_forward.1} parent=0
    _
  %s12 = ssub.s32 1, %s10
  %s13 = scalar_select 0, %s12, %s10
  loop: start=0, step=1, limit=4
  $region2: #{diffusion_planner_forward.1} parent=0 // loop_pre_header
    _
  $region3: #{diffusion_planner_forward.1} parent=0 // loop_header
    %s15 = sphi 0, %s19
    %p16 = scmp.ge.s32.totalorder %s15, 4
    %s22 = sphi 0, %s34
    %s23 = sphi 0, %s30
    %s24 = sphi 0, %s22
    %s25 = sphi 0, %s23
    %s26 = sphi 0, %s24
    %s27 = sphi 0, %s25
    %s39 = sphi 0, %s41
    %s42 = sphi 0, %s39
    %s43 = sphi 0, %s42
    %s59 = sphi 0, %s43
    %s65 = sphi 0, %s67
    %s68 = sphi 0, %s65
    %s69 = sphi 0, %s68
    %s85 = sphi 0, %s69
    %s89 = sphi 0, %s89
    %s91 = sphi 0, %s89
    %s92 = sphi 0, %s91
    %s106 = sphi 0, %s92
    %s110 = sphi 0, %s110
    %s112 = sphi 0, %s110
    %s113 = sphi 0, %s112
    %s127 = sphi 0, %s113
    %s131 = sphi 0, %s131
    %s133 = sphi 0, %s131
    %s134 = sphi 0, %s133
    %s148 = sphi 0, %s134
    %s152 = sphi 0, %s152
    %s154 = sphi 0, %s152
    %s155 = sphi 0, %s154
    %s169 = sphi 0, %s155
    %s173 = sphi 0, %s173
    %s175 = sphi 0, %s173
    %s176 = sphi 0, %s175
    %s190 = sphi 0, %s176
    %s194 = sphi 0, %s194
    %s196 = sphi 0, %s194
    %s197 = sphi 0, %s196
    %s211 = sphi 0, %s197
    %s215 = sphi 0, %s215
    %s217 = sphi 0, %s215
    %s218 = sphi 0, %s217
    %s232 = sphi 0, %s218
    %s240 = sphi 0, %s242
    %s243 = sphi 0, %s240
    %s244 = sphi 0, %s243
    %s260 = sphi 0, %s244
  $region4: #{diffusion_planner_forward.1} parent=0 // loop_header_branch
    %18 = sbr.rel (%p16) target = $region8
  $region5: #{diffusion_planner_forward.1} parent=0 // loop_body
    %s20 = ssub.s32 %s15, 1
    %s21 = ssub.s32 %s15, 2
    %s28 = sadd.s32 1, %s23
    %p29 = scmp.ge.s32.totalorder %s28, 1
    %s30 = scalar_select %p29, 0, %s28
    %s31 = sadd.s32 1, %s22
    %s32 = scalar_select %p29, %s31, %s22
    %p33 = scmp.ge.s32.totalorder %s32, 2
    %s34 = scalar_select %p33, 0, %s32
    %s35 = ssub.s32 %s22, %s34
    %s36 = ssub.s32 %s23, %s30
    %s37 = sor.u32 %s35, %s36
    %p38 = scmp.eq.s32.totalorder %s37, 0
    %s40 = sadd.s32 %s39, 1
    %s41 = scalar_select %p38, %s39, %s40
    %p44 = pneg %p38
    %p45 = scmp.eq.s32.totalorder %s15, 1
    %p46 = por %p44, %p45
    %p47 = scmp.ne.s32.totalorder %s39, %s42
    %p48 = scmp.eq.s32.totalorder %s15, 0
    %p49 = por %p47, %p48
    %p50 = scmp.ne.s32.totalorder %s39, %s42
    %p51 = scmp.eq.s32.totalorder %s20, 1
    %p52 = por %p50, %p51
    %p53 = scmp.ne.s32.totalorder %s42, %s43
    %p54 = scmp.eq.s32.totalorder %s20, 0
    %p55 = por %p53, %p54
    %p56 = scmp.ne.s32.totalorder %s42, %s43
    %p57 = scmp.eq.s32.totalorder %s21, 1
    %p58 = por %p56, %p57
    %p60 = scmp.ne.s32.totalorder %s43, %s59
    %p61 = scmp.eq.s32.totalorder %s21, 0
    %p62 = por %p60, %p61
    %s63 = ssub.s32 %s22, %s34
    %p64 = scmp.eq.s32.totalorder %s63, 0
    %s66 = sadd.s32 %s65, 1
    %s67 = scalar_select %p64, %s65, %s66
    %p70 = pneg %p64
    %p71 = scmp.eq.s32.totalorder %s15, 1
    %p72 = por %p70, %p71
    %p73 = scmp.ne.s32.totalorder %s65, %s68
    %p74 = scmp.eq.s32.totalorder %s15, 0
    %p75 = por %p73, %p74
    %p76 = scmp.ne.s32.totalorder %s65, %s68
    %p77 = scmp.eq.s32.totalorder %s20, 1
    %p78 = por %p76, %p77
    %p79 = scmp.ne.s32.totalorder %s68, %s69
    %p80 = scmp.eq.s32.totalorder %s20, 0
    %p81 = por %p79, %p80
    %p82 = scmp.ne.s32.totalorder %s68, %s69
    %p83 = scmp.eq.s32.totalorder %s21, 1
    %p84 = por %p82, %p83
    %p86 = scmp.ne.s32.totalorder %s69, %s85
    %p87 = scmp.eq.s32.totalorder %s21, 0
    %p88 = por %p86, %p87
    %s90 = sadd.s32 %s89, 1
    %p93 = scmp.eq.s32.totalorder %s15, 1
    %p94 = scmp.ne.s32.totalorder %s89, %s91
    %p95 = scmp.eq.s32.totalorder %s15, 0
    %p96 = por %p94, %p95
    %p97 = scmp.ne.s32.totalorder %s89, %s91
    %p98 = scmp.eq.s32.totalorder %s20, 1
    %p99 = por %p97, %p98
    %p100 = scmp.ne.s32.totalorder %s91, %s92
    %p101 = scmp.eq.s32.totalorder %s20, 0
    %p102 = por %p100, %p101
    %p103 = scmp.ne.s32.totalorder %s91, %s92
    %p104 = scmp.eq.s32.totalorder %s21, 1
    %p105 = por %p103, %p104
    %p107 = scmp.ne.s32.totalorder %s92, %s106
    %p108 = scmp.eq.s32.totalorder %s21, 0
    %p109 = por %p107, %p108
    %s111 = sadd.s32 %s110, 1
    %p114 = scmp.eq.s32.totalorder %s15, 1
    %p115 = scmp.ne.s32.totalorder %s110, %s112
    %p116 = scmp.eq.s32.totalorder %s15, 0
    %p117 = por %p115, %p116
    %p118 = scmp.ne.s32.totalorder %s110, %s112
    %p119 = scmp.eq.s32.totalorder %s20, 1
    %p120 = por %p118, %p119
    %p121 = scmp.ne.s32.totalorder %s112, %s113
    %p122 = scmp.eq.s32.totalorder %s20, 0
    %p123 = por %p121, %p122
    %p124 = scmp.ne.s32.totalorder %s112, %s113
    %p125 = scmp.eq.s32.totalorder %s21, 1
    %p126 = por %p124, %p125
    %p128 = scmp.ne.s32.totalorder %s113, %s127
    %p129 = scmp.eq.s32.totalorder %s21, 0
    %p130 = por %p128, %p129
    %s132 = sadd.s32 %s131, 1
    %p135 = scmp.eq.s32.totalorder %s15, 1
    %p136 = scmp.ne.s32.totalorder %s131, %s133
    %p137 = scmp.eq.s32.totalorder %s15, 0
    %p138 = por %p136, %p137
    %p139 = scmp.ne.s32.totalorder %s131, %s133
    %p140 = scmp.eq.s32.totalorder %s20, 1
    %p141 = por %p139, %p140
    %p142 = scmp.ne.s32.totalorder %s133, %s134
    %p143 = scmp.eq.s32.totalorder %s20, 0
    %p144 = por %p142, %p143
    %p145 = scmp.ne.s32.totalorder %s133, %s134
    %p146 = scmp.eq.s32.totalorder %s21, 1
    %p147 = por %p145, %p146
    %p149 = scmp.ne.s32.totalorder %s134, %s148
    %p150 = scmp.eq.s32.totalorder %s21, 0
    %p151 = por %p149, %p150
    %s153 = sadd.s32 %s152, 1
    %p156 = scmp.eq.s32.totalorder %s15, 1
    %p157 = scmp.ne.s32.totalorder %s152, %s154
    %p158 = scmp.eq.s32.totalorder %s15, 0
    %p159 = por %p157, %p158
    %p160 = scmp.ne.s32.totalorder %s152, %s154
    %p161 = scmp.eq.s32.totalorder %s20, 1
    %p162 = por %p160, %p161
    %p163 = scmp.ne.s32.totalorder %s154, %s155
    %p164 = scmp.eq.s32.totalorder %s20, 0
    %p165 = por %p163, %p164
    %p166 = scmp.ne.s32.totalorder %s154, %s155
    %p167 = scmp.eq.s32.totalorder %s21, 1
    %p168 = por %p166, %p167
    %p170 = scmp.ne.s32.totalorder %s155, %s169
    %p171 = scmp.eq.s32.totalorder %s21, 0
    %p172 = por %p170, %p171
    %s174 = sadd.s32 %s173, 1
    %p177 = scmp.eq.s32.totalorder %s15, 1
    %p178 = scmp.ne.s32.totalorder %s173, %s175
    %p179 = scmp.eq.s32.totalorder %s15, 0
    %p180 = por %p178, %p179
    %p181 = scmp.ne.s32.totalorder %s173, %s175
    %p182 = scmp.eq.s32.totalorder %s20, 1
    %p183 = por %p181, %p182
    %p184 = scmp.ne.s32.totalorder %s175, %s176
    %p185 = scmp.eq.s32.totalorder %s20, 0
    %p186 = por %p184, %p185
    %p187 = scmp.ne.s32.totalorder %s175, %s176
    %p188 = scmp.eq.s32.totalorder %s21, 1
    %p189 = por %p187, %p188
    %p191 = scmp.ne.s32.totalorder %s176, %s190
    %p192 = scmp.eq.s32.totalorder %s21, 0
    %p193 = por %p191, %p192
    %s195 = sadd.s32 %s194, 1
    %p198 = scmp.eq.s32.totalorder %s15, 1
    %p199 = scmp.ne.s32.totalorder %s194, %s196
    %p200 = scmp.eq.s32.totalorder %s15, 0
    %p201 = por %p199, %p200
    %p202 = scmp.ne.s32.totalorder %s194, %s196
    %p203 = scmp.eq.s32.totalorder %s20, 1
    %p204 = por %p202, %p203
    %p205 = scmp.ne.s32.totalorder %s196, %s197
    %p206 = scmp.eq.s32.totalorder %s20, 0
    %p207 = por %p205, %p206
    %p208 = scmp.ne.s32.totalorder %s196, %s197
    %p209 = scmp.eq.s32.totalorder %s21, 1
    %p210 = por %p208, %p209
    %p212 = scmp.ne.s32.totalorder %s197, %s211
    %p213 = scmp.eq.s32.totalorder %s21, 0
    %p214 = por %p212, %p213
    %s216 = sadd.s32 %s215, 1
    %p219 = scmp.eq.s32.totalorder %s15, 1
    %p220 = scmp.ne.s32.totalorder %s215, %s217
    %p221 = scmp.eq.s32.totalorder %s15, 0
    %p222 = por %p220, %p221
    %p223 = scmp.ne.s32.totalorder %s215, %s217
    %p224 = scmp.eq.s32.totalorder %s20, 1
    %p225 = por %p223, %p224
    %p226 = scmp.ne.s32.totalorder %s217, %s218
    %p227 = scmp.eq.s32.totalorder %s20, 0
    %p228 = por %p226, %p227
    %p229 = scmp.ne.s32.totalorder %s217, %s218
    %p230 = scmp.eq.s32.totalorder %s21, 1
    %p231 = por %p229, %p230
    %p233 = scmp.ne.s32.totalorder %s218, %s232
    %p234 = scmp.eq.s32.totalorder %s21, 0
    %p235 = por %p233, %p234
    %s236 = ssub.s32 %s22, %s34
    %s237 = ssub.s32 %s23, %s30
    %s238 = sor.u32 %s236, %s237
    %p239 = scmp.eq.s32.totalorder %s238, 0
    %s241 = sadd.s32 %s240, 1
    %s242 = scalar_select %p239, %s240, %s241
    %p245 = pneg %p239
    %p246 = scmp.eq.s32.totalorder %s15, 1
    %p247 = por %p245, %p246
    %p248 = scmp.ne.s32.totalorder %s240, %s243
    %p249 = scmp.eq.s32.totalorder %s15, 0
    %p250 = por %p248, %p249
    %p251 = scmp.ne.s32.totalorder %s240, %s243
    %p252 = scmp.eq.s32.totalorder %s20, 1
    %p253 = por %p251, %p252
    %p254 = scmp.ne.s32.totalorder %s243, %s244
    %p255 = scmp.eq.s32.totalorder %s20, 0
    %p256 = por %p254, %p255
    %p257 = scmp.ne.s32.totalorder %s243, %s244
    %p258 = scmp.eq.s32.totalorder %s21, 1
    %p259 = por %p257, %p258
    %p261 = scmp.ne.s32.totalorder %s244, %s260
    %p262 = scmp.eq.s32.totalorder %s21, 0
    %p263 = por %p261, %p262
    %p264 = scmp.le.s32.totalorder 1, %s15
    %p265 = scmp.lt.s32.totalorder %s15, 3
    %p266 = pnand %p264, %p265
    %p267 = pneg %p266
    // Predicated region
    $region9: #{diffusion_planner_forward.1} parent=5 // pred_check
      _
    $region10: #{diffusion_planner_forward.1} parent=5 // pred_check_branch
      %269 = sbr.rel (%p266) target = $region12
    $region11: #{diffusion_planner_forward.1} parent=5 // pred_region
      %s270 = ssub.s32 %s15, 1
      // Predicated region
      $region13: #{diffusion_planner_forward.1} parent=11 // pred_check
        %p271 = pneg %p102
      $region14: #{diffusion_planner_forward.1} parent=11 // pred_check_branch
        %273 = sbr.rel (%p271) target = $region16
      $region15: #{diffusion_planner_forward.1} parent=11 // pred_region
        _
      $region16: #{diffusion_planner_forward.1} parent=11 // pred_fallthru
        _
      // Predicated region
      $region17: #{diffusion_planner_forward.1} parent=11 // pred_check
        %p274 = pneg %p123
      $region18: #{diffusion_planner_forward.1} parent=11 // pred_check_branch
        %276 = sbr.rel (%p274) target = $region20
      $region19: #{diffusion_planner_forward.1} parent=11 // pred_region
        _
      $region20: #{diffusion_planner_forward.1} parent=11 // pred_fallthru
        _
      // Predicated region
      $region21: #{diffusion_planner_forward.1} parent=11 // pred_check
        %p277 = pneg %p144
      $region22: #{diffusion_planner_forward.1} parent=11 // pred_check_branch
        %279 = sbr.rel (%p277) target = $region24
      $region23: #{diffusion_planner_forward.1} parent=11 // pred_region
        _
      $region24: #{diffusion_planner_forward.1} parent=11 // pred_fallthru
        _
      // Predicated region
      $region25: #{diffusion_planner_forward.1} parent=11 // pred_check
        %p280 = pneg %p165
      $region26: #{diffusion_planner_forward.1} parent=11 // pred_check_branch
        %282 = sbr.rel (%p280) target = $region28
      $region27: #{diffusion_planner_forward.1} parent=11 // pred_region
        _
      $region28: #{diffusion_planner_forward.1} parent=11 // pred_fallthru
        _
      // Predicated region
      $region29: #{diffusion_planner_forward.1} parent=11 // pred_check
        %p283 = pneg %p186
      $region30: #{diffusion_planner_forward.1} parent=11 // pred_check_branch
        %285 = sbr.rel (%p283) target = $region32
      $region31: #{diffusion_planner_forward.1} parent=11 // pred_region
        _
      $region32: #{diffusion_planner_forward.1} parent=11 // pred_fallthru
        _
      // Predicated region
      $region33: #{diffusion_planner_forward.1} parent=11 // pred_check
        %p286 = pneg %p207
      $region34: #{diffusion_planner_forward.1} parent=11 // pred_check_branch
        %288 = sbr.rel (%p286) target = $region36
      $region35: #{diffusion_planner_forward.1} parent=11 // pred_region
        _
      $region36: #{diffusion_planner_forward.1} parent=11 // pred_fallthru
        _
      // Predicated region
      $region37: #{diffusion_planner_forward.1} parent=11 // pred_check
        %p289 = pneg %p228
      $region38: #{diffusion_planner_forward.1} parent=11 // pred_check_branch
        %291 = sbr.rel (%p289) target = $region40
      $region39: #{diffusion_planner_forward.1} parent=11 // pred_region
        _
      $region40: #{diffusion_planner_forward.1} parent=11 // pred_fallthru
        _
    $region12: #{diffusion_planner_forward.1} parent=5 // pred_fallthru
      _
    %p292 = scmp.lt.s32.totalorder %s15, 2
    // Predicated region
    $region41: #{diffusion_planner_forward.1} parent=5 // pred_check
      %p293 = pneg %p292
    $region42: #{diffusion_planner_forward.1} parent=5 // pred_check_branch
      %295 = sbr.rel (%p293) target = $region44
    $region43: #{diffusion_planner_forward.1} parent=5 // pred_region
      // Predicated region
      $region45: #{diffusion_planner_forward.1} parent=43 // pred_check
        %p296 = pneg %p49
      $region46: #{diffusion_planner_forward.1} parent=43 // pred_check_branch
        %298 = sbr.rel (%p296) target = $region48
      $region47: #{diffusion_planner_forward.1} parent=43 // pred_region
        %p299 = scmp.lt.s32.totalorder %s22, 1
        %s300 = scalar_select %p299, %s22, 1
        %p301 = scmp.lt.s32.totalorder %s23, 0
        %s302 = scalar_select %p301, %s23, 0
        %s303 = sadd.s32 %s302, %s300
        %s304 = smul.addr %s303, 8
        %s305 = scalar_lea.vmem %s0, %s304
      $region48: #{diffusion_planner_forward.1} parent=43 // pred_fallthru
        _
      // Predicated region
      $region49: #{diffusion_planner_forward.1} parent=43 // pred_check
        %p306 = pneg %p75
      $region50: #{diffusion_planner_forward.1} parent=43 // pred_check_branch
        %308 = sbr.rel (%p306) target = $region52
      $region51: #{diffusion_planner_forward.1} parent=43 // pred_region
        %p309 = scmp.lt.s32.totalorder %s22, 1
        %s310 = scalar_select %p309, %s22, 1
        %s311 = scalar_lea.vmem %s1, %s310
      $region52: #{diffusion_planner_forward.1} parent=43 // pred_fallthru
        _
    $region44: #{diffusion_planner_forward.1} parent=5 // pred_fallthru
      _
    %p312 = scmp.le.s32.totalorder 1, %s15
    %p313 = scmp.lt.s32.totalorder %s15, 3
    %p314 = pnand %p312, %p313
    %p315 = pneg %p314
    // Predicated region
    $region53: #{diffusion_planner_forward.1} parent=5 // pred_check
      _
    $region54: #{diffusion_planner_forward.1} parent=5 // pred_check_branch
      %317 = sbr.rel (%p314) target = $region56
    $region55: #{diffusion_planner_forward.1} parent=5 // pred_region
      %s318 = ssub.s32 %s15, 1
      %p319 = scmp.lt.s32.totalorder %s24, 1
      %s320 = scalar_select %p319, %s24, 1
      %p321 = scmp.lt.s32.totalorder %s25, 0
      %s322 = scalar_select %p321, %s25, 0
      %s323 = sadd.s32 %s322, %s320
      %s324 = smul.addr %s323, 8
      %s325 = scalar_lea.vmem %s0, %s324
      %p326 = pneg %p55
      %p327 = pneg %p52
      %p328 = scmp.lt.s32.totalorder %s24, 1
      %s329 = scalar_select %p328, %s24, 1
      %s330 = scalar_lea.vmem %s1, %s329
      %p331 = pneg %p81
      %p332 = pneg %p78
      %p333 = pneg %p102
      %p334 = pneg %p99
      %p335 = pneg %p123
      %p336 = pneg %p120
      %p337 = pneg %p144
      %p338 = pneg %p141
      %p339 = pneg %p165
      %p340 = pneg %p162
      %p341 = pneg %p186
      %p342 = pneg %p183
      %p343 = pneg %p207
      %p344 = pneg %p204
      %p345 = pneg %p228
      %p346 = pneg %p225
      %p347 = pneg %p256
      %p348 = pneg %p253
      %p349 = scmp.lt.s32.totalorder %s24, 1
      %s350 = scalar_select %p349, %s24, 1
      %p351 = scmp.lt.s32.totalorder %s25, 0
      %s352 = scalar_select %p351, %s25, 0
      %s353 = sadd.s32 %s352, %s350
      %s354 = smul.addr %s353, 8
      %s355 = scalar_lea.vmem %s9, %s354
      %p356 = scmp.lt.s32.totalorder %s24, 1
      %s357 = scalar_select %p356, %s24, 1
      %p358 = scmp.lt.s32.totalorder %s25, 0
      %s359 = scalar_select %p358, %s25, 0
      %s360 = sadd.s32 %s359, %s357
      %s361 = smul.addr %s360, 8
      %s362 = scalar_lea.vmem %s0, %s361
      %p363 = scmp.lt.s32.totalorder %s24, 1
      %s364 = scalar_select %p363, %s24, 1
      %s365 = scalar_lea.vmem %s1, %s364
      %p366 = scmp.lt.s32.totalorder %s24, 1
      %s367 = scalar_select %p366, %s24, 1
      %p368 = scmp.lt.s32.totalorder %s25, 0
      %s369 = scalar_select %p368, %s25, 0
      %s370 = sadd.s32 %s369, %s367
      %s371 = smul.addr %s370, 8
      %s372 = scalar_lea.vmem %s9, %s371
      %v373 = vld [vmem:[%s362] sm:$0xff]
      %v374 = vld [vmem:[%s2] sm:$0x3f]
      %v375 = vld [vmem:[%s365] sm:$0x1]
      %v377 = vlaneseq
      %v378 = vshrl.u32 %v377, 7
      %v379 = vsub.s32 0, %v378
      %v380 = vrot.slane %v375, %v379
      %vm382 = vcmask 48128
      %v384 = vsel %vm382, %v373, 0
      %vm386 = vcmask 1045504
      %v388 = vsel %vm386, %v374, 0
      %390 = vmatprep.subr.mxu0 0.0
      %391 = vmatpush1.msra.mxu0 %v388
      %392 = vmatprep.subr.mxu0 0.0
      %393 = vmatpush1.msra.mxu0 0.0
      %394 = vmatprep.subr.mxu0 0.0
      %395 = vmatpush1.msra.mxu0 0.0
      %396 = vmatprep.subr.mxu0 0.0
      %397 = vmatpush1.msra.mxu0 0.0
      %398 = vmatprep.subr.mxu0 0.0
      %399 = vmatpush1.msra.mxu0 0.0
      %400 = vmatprep.subr.mxu0 0.0
      %401 = vmatpush1.msra.mxu0 0.0
      %402 = vmatprep.subr.mxu0 0.0
      %403 = vmatpush1.msra.mxu0 0.0
      %404 = vmatprep.subr.mxu0 0.0
      %405 = vmatpush1.msra.mxu0 0.0
      %406 = vmatprep.subr.mxu0 0.0
      %407 = vmatpush1.msra.mxu0 0.0
      %408 = vmatprep.subr.mxu0 0.0
      %409 = vmatpush1.msra.mxu0 0.0
      %410 = vmatprep.subr.mxu0 0.0
      %411 = vmatpush1.msra.mxu0 0.0
      %412 = vmatprep.subr.mxu0 0.0
      %413 = vmatpush1.msra.mxu0 0.0
      %414 = vmatprep.subr.mxu0 0.0
      %415 = vmatpush1.msra.mxu0 0.0
      %416 = vmatprep.subr.mxu0 0.0
      %417 = vmatpush1.msra.mxu0 0.0
      %418 = vmatprep.subr.mxu0 0.0
      %419 = vmatpush1.msra.mxu0 0.0
      %420 = vmatprep.subr.mxu0 0.0
      %421 = vmatpush1.msra.mxu0 0.0
      %422 = vmatprep.subr.mxu0 0.0
      %423 = vmatpush1.msra.mxu0 0.0
      %424 = vmatprep.subr.mxu0 0.0
      %425 = vmatpush1.msra.mxu0 0.0
      %426 = vmatprep.subr.mxu0 0.0
      %427 = vmatpush1.msra.mxu0 0.0
      %428 = vmatprep.subr.mxu0 0.0
      %429 = vmatpush1.msra.mxu0 0.0
      %430 = vmatprep.subr.mxu0 0.0
      %431 = vmatpush1.msra.mxu0 0.0
      %432 = vmatprep.subr.mxu0 0.0
      %433 = vmatpush1.msra.mxu0 0.0
      %434 = vmatprep.subr.mxu0 0.0
      %435 = vmatpush1.msra.mxu0 0.0
      %436 = vmatprep.subr.mxu0 0.0
      %437 = vmatpush1.msra.mxu0 0.0
      %438 = vmatprep.subr.mxu0 0.0
      %439 = vmatpush1.msra.mxu0 0.0
      %440 = vmatprep.subr.mxu0 0.0
      %441 = vmatpush1.msra.mxu0 0.0
      %442 = vmatprep.subr.mxu0 0.0
      %443 = vmatpush1.msra.mxu0 0.0
      %444 = vmatprep.subr.mxu0 0.0
      %445 = vmatpush1.msra.mxu0 0.0
      %446 = vmatprep.subr.mxu0 0.0
      %447 = vmatpush1.msra.mxu0 0.0
      %448 = vmatprep.subr.mxu0 0.0
      %449 = vmatpush1.msra.mxu0 0.0
      %450 = vmatprep.subr.mxu0 0.0
      %451 = vmatpush1.msra.mxu0 0.0
      %452 = vmatprep.subr.mxu0 0.0
      %453 = vmatpush1.msra.mxu0 0.0
      %454 = vmatprep.mubr.f32.mxu0 0.0
      %455 = vmatmul.mubr.f32.gmra.mrb[0].mxu0 %v384
      %v456 = vpop.f32.mrb[0].mxu0
      %v457 = vadd.f32 %v380, %v456
      %v458 = vpop.f32.mrb[0].mxu0
      %459 = vdwg.mxu0
      %v460 = vmax.f32 %v457, 0.0
      %v461 = vld [vmem:[%s3] sm:$0xff]
      %v462 = vld [vmem:[%s3 + $0x8] sm:$0xff]
      %v463 = vld [vmem:[%s3 + $0x10] sm:$0xff]
      %v464 = vld [vmem:[%s3 + $0x18] sm:$0xff]
      %v465 = vld [vmem:[%s4] sm:$0x1]
      %v467 = vlaneseq
      %v468 = vshrl.u32 %v467, 7
      %v469 = vsub.s32 0, %v468
      %v470 = vrot.slane %v465, %v469
      %vm472 = vcmask 261120
      %v474 = vsel %vm472, %v460, 0
      %476 = vmatprep.subr.mxu0 0.0
      %477 = vmatpush1.msra.mxu0 %v461
      %478 = vmatprep.subr.mxu0 0.0
      %479 = vmatpush1.msra.mxu0 %v462
      %480 = vmatprep.subr.mxu0 0.0
      %481 = vmatpush1.msra.mxu0 %v463
      %482 = vmatprep.subr.mxu0 0.0
      %483 = vmatpush1.msra.mxu0 %v464
      %484 = vmatprep.subr.mxu0 0.0
      %485 = vmatpush1.msra.mxu0 0.0
      %486 = vmatprep.subr.mxu0 0.0
      %487 = vmatpush1.msra.mxu0 0.0
      %488 = vmatprep.subr.mxu0 0.0
      %489 = vmatpush1.msra.mxu0 0.0
      %490 = vmatprep.subr.mxu0 0.0
      %491 = vmatpush1.msra.mxu0 0.0
      %492 = vmatprep.subr.mxu0 0.0
      %493 = vmatpush1.msra.mxu0 0.0
      %494 = vmatprep.subr.mxu0 0.0
      %495 = vmatpush1.msra.mxu0 0.0
      %496 = vmatprep.subr.mxu0 0.0
      %497 = vmatpush1.msra.mxu0 0.0
      %498 = vmatprep.subr.mxu0 0.0
      %499 = vmatpush1.msra.mxu0 0.0
      %500 = vmatprep.subr.mxu0 0.0
      %501 = vmatpush1.msra.mxu0 0.0
      %502 = vmatprep.subr.mxu0 0.0
      %503 = vmatpush1.msra.mxu0 0.0
      %504 = vmatprep.subr.mxu0 0.0
      %505 = vmatpush1.msra.mxu0 0.0
      %506 = vmatprep.subr.mxu0 0.0
      %507 = vmatpush1.msra.mxu0 0.0
      %508 = vmatprep.subr.mxu0 0.0
      %509 = vmatpush1.msra.mxu0 0.0
      %510 = vmatprep.subr.mxu0 0.0
      %511 = vmatpush1.msra.mxu0 0.0
      %512 = vmatprep.subr.mxu0 0.0
      %513 = vmatpush1.msra.mxu0 0.0
      %514 = vmatprep.subr.mxu0 0.0
      %515 = vmatpush1.msra.mxu0 0.0
      %516 = vmatprep.subr.mxu0 0.0
      %517 = vmatpush1.msra.mxu0 0.0
      %518 = vmatprep.subr.mxu0 0.0
      %519 = vmatpush1.msra.mxu0 0.0
      %520 = vmatprep.subr.mxu0 0.0
      %521 = vmatpush1.msra.mxu0 0.0
      %522 = vmatprep.subr.mxu0 0.0
      %523 = vmatpush1.msra.mxu0 0.0
      %524 = vmatprep.subr.mxu0 0.0
      %525 = vmatpush1.msra.mxu0 0.0
      %526 = vmatprep.subr.mxu0 0.0
      %527 = vmatpush1.msra.mxu0 0.0
      %528 = vmatprep.subr.mxu0 0.0
      %529 = vmatpush1.msra.mxu0 0.0
      %530 = vmatprep.subr.mxu0 0.0
      %531 = vmatpush1.msra.mxu0 0.0
      %532 = vmatprep.subr.mxu0 0.0
      %533 = vmatpush1.msra.mxu0 0.0
      %534 = vmatprep.subr.mxu0 0.0
      %535 = vmatpush1.msra.mxu0 0.0
      %536 = vmatprep.subr.mxu0 0.0
      %537 = vmatpush1.msra.mxu0 0.0
      %538 = vmatprep.subr.mxu0 0.0
      %539 = vmatpush1.msra.mxu0 0.0
      %540 = vmatprep.mubr.f32.mxu0 0.0
      %541 = vmatmul.mubr.f32.gmra.mrb[0].mxu0 %v474
      %v542 = vpop.f32.mrb[0].mxu0
      %v543 = vadd.f32 %v470, %v542
      %v544 = vpop.f32.mrb[0].mxu0
      %545 = vdwg.mxu0
      %v546 = vmax.f32 %v543, 0.0
      %v547 = vld [vmem:[%s5] sm:$0xff]
      %v548 = vld [vmem:[%s5 + $0x8] sm:$0xff]
      %v549 = vld [vmem:[%s5 + $0x10] sm:$0xff]
      %v550 = vld [vmem:[%s5 + $0x18] sm:$0xff]
      %v551 = vld [vmem:[%s6] sm:$0x1]
      %v553 = vlaneseq
      %v554 = vshrl.u32 %v553, 7
      %v555 = vsub.s32 0, %v554
      %v556 = vrot.slane %v551, %v555
      %v559 = vsel %vm472, %v546, 0
      %561 = vmatprep.subr.mxu0 0.0
      %562 = vmatpush1.msra.mxu0 %v547
      %563 = vmatprep.subr.mxu0 0.0
      %564 = vmatpush1.msra.mxu0 %v548
      %565 = vmatprep.subr.mxu0 0.0
      %566 = vmatpush1.msra.mxu0 %v549
      %567 = vmatprep.subr.mxu0 0.0
      %568 = vmatpush1.msra.mxu0 %v550
      %569 = vmatprep.subr.mxu0 0.0
      %570 = vmatpush1.msra.mxu0 0.0
      %571 = vmatprep.subr.mxu0 0.0
      %572 = vmatpush1.msra.mxu0 0.0
      %573 = vmatprep.subr.mxu0 0.0
      %574 = vmatpush1.msra.mxu0 0.0
      %575 = vmatprep.subr.mxu0 0.0
      %576 = vmatpush1.msra.mxu0 0.0
      %577 = vmatprep.subr.mxu0 0.0
      %578 = vmatpush1.msra.mxu0 0.0
      %579 = vmatprep.subr.mxu0 0.0
      %580 = vmatpush1.msra.mxu0 0.0
      %581 = vmatprep.subr.mxu0 0.0
      %582 = vmatpush1.msra.mxu0 0.0
      %583 = vmatprep.subr.mxu0 0.0
      %584 = vmatpush1.msra.mxu0 0.0
      %585 = vmatprep.subr.mxu0 0.0
      %586 = vmatpush1.msra.mxu0 0.0
      %587 = vmatprep.subr.mxu0 0.0
      %588 = vmatpush1.msra.mxu0 0.0
      %589 = vmatprep.subr.mxu0 0.0
      %590 = vmatpush1.msra.mxu0 0.0
      %591 = vmatprep.subr.mxu0 0.0
      %592 = vmatpush1.msra.mxu0 0.0
      %593 = vmatprep.subr.mxu0 0.0
      %594 = vmatpush1.msra.mxu0 0.0
      %595 = vmatprep.subr.mxu0 0.0
      %596 = vmatpush1.msra.mxu0 0.0
      %597 = vmatprep.subr.mxu0 0.0
      %598 = vmatpush1.msra.mxu0 0.0
      %599 = vmatprep.subr.mxu0 0.0
      %600 = vmatpush1.msra.mxu0 0.0
      %601 = vmatprep.subr.mxu0 0.0
      %602 = vmatpush1.msra.mxu0 0.0
      %603 = vmatprep.subr.mxu0 0.0
      %604 = vmatpush1.msra.mxu0 0.0
      %605 = vmatprep.subr.mxu0 0.0
      %606 = vmatpush1.msra.mxu0 0.0
      %607 = vmatprep.subr.mxu0 0.0
      %608 = vmatpush1.msra.mxu0 0.0
      %609 = vmatprep.subr.mxu0 0.0
      %610 = vmatpush1.msra.mxu0 0.0
      %611 = vmatprep.subr.mxu0 0.0
      %612 = vmatpush1.msra.mxu0 0.0
      %613 = vmatprep.subr.mxu0 0.0
      %614 = vmatpush1.msra.mxu0 0.0
      %615 = vmatprep.subr.mxu0 0.0
      %616 = vmatpush1.msra.mxu0 0.0
      %617 = vmatprep.subr.mxu0 0.0
      %618 = vmatpush1.msra.mxu0 0.0
      %619 = vmatprep.subr.mxu0 0.0
      %620 = vmatpush1.msra.mxu0 0.0
      %621 = vmatprep.subr.mxu0 0.0
      %622 = vmatpush1.msra.mxu0 0.0
      %623 = vmatprep.subr.mxu0 0.0
      %624 = vmatpush1.msra.mxu0 0.0
      %625 = vmatprep.mubr.f32.mxu0 0.0
      %626 = vmatmul.mubr.f32.gmra.mrb[0].mxu0 %v559
      %v627 = vpop.f32.mrb[0].mxu0
      %v628 = vadd.f32 %v556, %v627
      %v629 = vpop.f32.mrb[0].mxu0
      %630 = vdwg.mxu0
      %v631 = vmax.f32 %v628, 0.0
      %v632 = vld [vmem:[%s7] sm:$0xff]
      %v633 = vld [vmem:[%s7 + $0x8] sm:$0xff]
      %v634 = vld [vmem:[%s7 + $0x10] sm:$0xff]
      %v635 = vld [vmem:[%s7 + $0x18] sm:$0xff]
      %v636 = vld [vmem:[%s8] sm:$0x1]
      %v638 = vlaneseq
      %v639 = vshrl.u32 %v638, 7
      %v640 = vsub.s32 0, %v639
      %v641 = vrot.slane %v636, %v640
      %v644 = vsel %vm472, %v631, 0
      %646 = vmatprep.subr.mxu0 0.0
      %647 = vmatpush1.msra.mxu0 %v632
      %648 = vmatprep.subr.mxu0 0.0
      %649 = vmatpush1.msra.mxu0 %v633
      %650 = vmatprep.subr.mxu0 0.0
      %651 = vmatpush1.msra.mxu0 %v634
      %652 = vmatprep.subr.mxu0 0.0
      %653 = vmatpush1.msra.mxu0 %v635
      %654 = vmatprep.subr.mxu0 0.0
      %655 = vmatpush1.msra.mxu0 0.0
      %656 = vmatprep.subr.mxu0 0.0
      %657 = vmatpush1.msra.mxu0 0.0
      %658 = vmatprep.subr.mxu0 0.0
      %659 = vmatpush1.msra.mxu0 0.0
      %660 = vmatprep.subr.mxu0 0.0
      %661 = vmatpush1.msra.mxu0 0.0
      %662 = vmatprep.subr.mxu0 0.0
      %663 = vmatpush1.msra.mxu0 0.0
      %664 = vmatprep.subr.mxu0 0.0
      %665 = vmatpush1.msra.mxu0 0.0
      %666 = vmatprep.subr.mxu0 0.0
      %667 = vmatpush1.msra.mxu0 0.0
      %668 = vmatprep.subr.mxu0 0.0
      %669 = vmatpush1.msra.mxu0 0.0
      %670 = vmatprep.subr.mxu0 0.0
      %671 = vmatpush1.msra.mxu0 0.0
      %672 = vmatprep.subr.mxu0 0.0
      %673 = vmatpush1.msra.mxu0 0.0
      %674 = vmatprep.subr.mxu0 0.0
      %675 = vmatpush1.msra.mxu0 0.0
      %676 = vmatprep.subr.mxu0 0.0
      %677 = vmatpush1.msra.mxu0 0.0
      %678 = vmatprep.subr.mxu0 0.0
      %679 = vmatpush1.msra.mxu0 0.0
      %680 = vmatprep.subr.mxu0 0.0
      %681 = vmatpush1.msra.mxu0 0.0
      %682 = vmatprep.subr.mxu0 0.0
      %683 = vmatpush1.msra.mxu0 0.0
      %684 = vmatprep.subr.mxu0 0.0
      %685 = vmatpush1.msra.mxu0 0.0
      %686 = vmatprep.subr.mxu0 0.0
      %687 = vmatpush1.msra.mxu0 0.0
      %688 = vmatprep.subr.mxu0 0.0
      %689 = vmatpush1.msra.mxu0 0.0
      %690 = vmatprep.subr.mxu0 0.0
      %691 = vmatpush1.msra.mxu0 0.0
      %692 = vmatprep.subr.mxu0 0.0
      %693 = vmatpush1.msra.mxu0 0.0
      %694 = vmatprep.subr.mxu0 0.0
      %695 = vmatpush1.msra.mxu0 0.0
      %696 = vmatprep.subr.mxu0 0.0
      %697 = vmatpush1.msra.mxu0 0.0
      %698 = vmatprep.subr.mxu0 0.0
      %699 = vmatpush1.msra.mxu0 0.0
      %700 = vmatprep.subr.mxu0 0.0
      %701 = vmatpush1.msra.mxu0 0.0
      %702 = vmatprep.subr.mxu0 0.0
      %703 = vmatpush1.msra.mxu0 0.0
      %704 = vmatprep.subr.mxu0 0.0
      %705 = vmatpush1.msra.mxu0 0.0
      %706 = vmatprep.subr.mxu0 0.0
      %707 = vmatpush1.msra.mxu0 0.0
      %708 = vmatprep.subr.mxu0 0.0
      %709 = vmatpush1.msra.mxu0 0.0
      %710 = vmatprep.mubr.f32.mxu0 0.0
      %711 = vmatmul.mubr.f32.gmra.mrb[0].mxu0 %v644
      %v712 = vpop.f32.mrb[0].mxu0
      %v713 = vadd.f32 %v641, %v712
      %v714 = vpop.f32.mrb[0].mxu0
      %715 = vdwg.mxu0
      %716 = vst.msk [vmem:[%s372] sm:$0xff] %vm382, %v713
      %p717 = scmp.lt.s32.totalorder %s24, 1
      %s718 = scalar_select %p717, %s24, 1
      %p719 = scmp.lt.s32.totalorder %s25, 0
      %s720 = scalar_select %p719, %s25, 0
      %s721 = sadd.s32 %s720, %s718
      %s722 = smul.addr %s721, 8
      %s723 = scalar_lea.vmem %s9, %s722
      // Predicated region
      $region57: #{diffusion_planner_forward.1} parent=55 // pred_check
        %p724 = pneg %p253
      $region58: #{diffusion_planner_forward.1} parent=55 // pred_check_branch
        %726 = sbr.rel (%p724) target = $region60
      $region59: #{diffusion_planner_forward.1} parent=55 // pred_region
        _
      $region60: #{diffusion_planner_forward.1} parent=55 // pred_fallthru
        _
    $region56: #{diffusion_planner_forward.1} parent=5 // pred_fallthru
      _
    %p727 = scmp.le.s32.totalorder 2, %s15
    // Predicated region
    $region61: #{diffusion_planner_forward.1} parent=5 // pred_check
      %p728 = pneg %p727
    $region62: #{diffusion_planner_forward.1} parent=5 // pred_check_branch
      %730 = sbr.rel (%p728) target = $region64
    $region63: #{diffusion_planner_forward.1} parent=5 // pred_region
      %s731 = ssub.s32 %s15, 2
      // Predicated region
      $region65: #{diffusion_planner_forward.1} parent=63 // pred_check
        %p732 = pneg %p259
      $region66: #{diffusion_planner_forward.1} parent=63 // pred_check_branch
        %734 = sbr.rel (%p732) target = $region68
      $region67: #{diffusion_planner_forward.1} parent=63 // pred_region
        %p735 = scmp.lt.s32.totalorder %s26, 1
        %s736 = scalar_select %p735, %s26, 1
        %p737 = scmp.lt.s32.totalorder %s27, 0
        %s738 = scalar_select %p737, %s27, 0
        %s739 = sadd.s32 %s738, %s736
        %s740 = smul.addr %s739, 8
        %s741 = scalar_lea.vmem %s9, %s740
      $region68: #{diffusion_planner_forward.1} parent=63 // pred_fallthru
        _
    $region64: #{diffusion_planner_forward.1} parent=5 // pred_fallthru
      _
  $region6: #{diffusion_planner_forward.1} parent=0 // loop_footer
    %s19 = sadd.s32 1, %s15
  $region7: #{diffusion_planner_forward.1} parent=0 // loop_footer_branch
    %14 = sbr.rel target = $region3
  $region8: #{diffusion_planner_forward.1} parent=0 // loop_exit
    _

</llo_original>
